<compile_context>
chip_gen: v7x
topology: tpu7x:2x2x1
jax: 0.10.0
libtpu: 0.0.40
codegen_flags: <defaults>
</compile_context>

<pallas_src>
import jax
import jax.numpy as jnp
from jax.experimental import pallas as pl
from jax.experimental.pallas import tpu as pltpu


def _round_up(x: int, m: int) -> int:
    return ((x + m - 1) // m) * m


def _linreg_kernel(x_ref, w_ref, b_ref, o_ref):
    # x_ref: (TILE_R, Dp) VMEM, w_ref: (Dp, P) VMEM, b_ref: (1,) SMEM scalar,
    # o_ref: (TILE_R, P) VMEM.  One MXU matmul per tile + scalar bias add.
    bias = b_ref[0]  # scalar read from SMEM
    y = jnp.dot(x_ref[...], w_ref[...], preferred_element_type=jnp.float32)
    o_ref[...] = (y + bias).astype(o_ref.dtype)


def linear_regression_forward(x, w, b, *, tile_rows=1024):
    """y_hat = x @ w + b.  x: (B, D) f32, w: (D, 1) f32, b: (1,) f32 -> (B, 1) f32."""
    B, D = x.shape
    dtype = x.dtype

    # Lane-packing factor: fold `pack` batch rows into one 128-lane row.
    pack = (128 // D) if (0 < D <= 128 and 128 % D == 0) else 1
    Dp = D * pack

    # Packed weight: Wp[j*D + k, j] = w[k]  (block-diagonal replication of w).
    if pack > 1:
        w_packed = jnp.kron(jnp.eye(pack, dtype=dtype), w.astype(dtype))
    else:
        w_packed = w.astype(dtype)

    # Rows of the packed view, and rows per grid step (sublane-aligned).
    rows_total = (B + pack - 1) // pack
    tile_r = min(tile_rows, _round_up(rows_total, 8))
    tile_r = max(8, _round_up(tile_r, 8))

    rows_pad = _round_up(rows_total, tile_r)
    b_pad = rows_pad * pack
    if b_pad != B:
        # Zero rows produce y = b and are sliced off below.
        x = jnp.pad(x, ((0, b_pad - B), (0, 0)))
    x_packed = x.reshape(rows_pad, Dp)

    grid = (rows_pad // tile_r,)

    out = pl.pallas_call(
        _linreg_kernel,
        out_shape=jax.ShapeDtypeStruct((rows_pad, pack), dtype),
        grid_spec=pltpu.PrefetchScalarGridSpec(
            num_scalar_prefetch=0,
            grid=grid,
            in_specs=[
                # X: streamed, lane-dense batch tile (double-buffered by the pipeline).
                pl.BlockSpec((tile_r, Dp), lambda i: (i, 0)),
                # w: same tiny block every step (stays VMEM-resident).
                pl.BlockSpec((Dp, pack), lambda i: (0, 0)),
                # bias: scalar path (SMEM), no per-step VMEM tile/DMA.
                pl.BlockSpec(memory_space=pltpu.MemorySpace.SMEM),
            ],
            out_specs=pl.BlockSpec((tile_r, pack), lambda i: (i, 0)),
        ),
        compiler_params=pltpu.CompilerParams(
            # Independent batch tiles -> shard across TensorCores (v7x megacore).
            dimension_semantics=("parallel",),
        ),
    )(x_packed, w_packed, b)

    # (rows_pad, pack) row-major == (b_pad, 1) in original row order.
    return out.reshape(b_pad, 1)[:B]


if __name__ == "__main__":
    # Module hyperparameters (deterministic init, sigma=0.01 as in __init__).
    num_inputs = 32
    batch = 8
    sigma = 0.01

    key = jax.random.PRNGKey(0)
    kx, kw, kx2, kx3, kw3 = jax.random.split(key, 5)

    x = jax.random.normal(kx, (batch, num_inputs), dtype=jnp.float32)
    w = sigma * jax.random.normal(kw, (num_inputs, 1), dtype=jnp.float32)
    b = jnp.zeros((1,), dtype=jnp.float32)

    y_hat = jax.block_until_ready(linear_regression_forward(x, w, b))
    ref = x @ w + b
    assert y_hat.shape == (batch, 1)
    assert jnp.allclose(y_hat, ref, atol=1e-5), "mismatch vs reference (small batch)"

    # Batch not divisible by tile/pack -> exercises multi-tile grid + tail padding.
    batch2 = 300
    x2 = jax.random.normal(kx2, (batch2, num_inputs), dtype=jnp.float32)
    y_hat2 = jax.block_until_ready(linear_regression_forward(x2, w, b, tile_rows=64))
    ref2 = x2 @ w + b
    assert y_hat2.shape == (batch2, 1)
    assert jnp.allclose(y_hat2, ref2, atol=1e-5), "mismatch vs reference (tiled batch)"

    # Feature width that does not divide 128 -> exercises the unpacked fallback.
    num_inputs3, batch3 = 48, 16
    x3 = jax.random.normal(kx3, (batch3, num_inputs3), dtype=jnp.float32)
    w3 = sigma * jax.random.normal(kw3, (num_inputs3, 1), dtype=jnp.float32)
    y_hat3 = jax.block_until_ready(linear_regression_forward(x3, w3, b))
    ref3 = x3 @ w3 + b
    assert y_hat3.shape == (batch3, 1)
    assert jnp.allclose(y_hat3, ref3, atol=1e-5), "mismatch vs reference (fallback path)"

    print("KERNEL_OK")
</pallas_src>

<mosaic_0001>
module attributes {stable_mosaic.version = 11 : i64} {
  func.func @_linreg_kernel(%arg0: i32, %arg1: memref<8x128xf32, #tpu.memory_space<vmem>>, %arg2: memref<128x4xf32, #tpu.memory_space<vmem>>, %arg3: memref<1xf32, #tpu.memory_space<smem>>, %arg4: memref<8x4xf32, #tpu.memory_space<vmem>>) attributes {dimension_semantics = [#tpu.dimension_semantics<parallel>], iteration_bounds = array<i64: 1>, scalar_prefetch = 0 : i64, scratch_operands = 0 : i64, tpu.core_type = #tpu.core_type<tc>, window_params = [{transform_indices = @transform_0, window_bounds = array<i64: 8, 128>}, {pipeline_mode = #tpu.pipeline_mode<synchronous>, transform_indices = @transform_1, window_bounds = array<i64: 128, 4>}, {transform_indices = @transform_2, window_bounds = array<i64: 1>}, {transform_indices = @transform_3, window_bounds = array<i64: 8, 4>}]} {
    %c0 = arith.constant 0 : index
    %0 = memref.load %arg3[%c0] : memref<1xf32, #tpu.memory_space<smem>>
    %c0_0 = arith.constant 0 : index
    %c0_1 = arith.constant 0 : index
    %1 = vector.load %arg1[%c0_0, %c0_1] : memref<8x128xf32, #tpu.memory_space<vmem>>, vector<8x128xf32>
    %c0_2 = arith.constant 0 : index
    %c0_3 = arith.constant 0 : index
    %2 = vector.load %arg2[%c0_2, %c0_3] : memref<128x4xf32, #tpu.memory_space<vmem>>, vector<128x4xf32>
    %cst = arith.constant dense<0.000000e+00> : vector<8x4xf32>
    %3 = tpu.matmul %1, %2, %cst {dimension_numbers = #tpu.dot_dimension_numbers<[1], [0], [0], [1], [0, 0, 1, 1], [], []>} : vector<8x128xf32>, vector<128x4xf32>, vector<8x4xf32> -> vector<8x4xf32>
    %4 = vector.broadcast %0 : f32 to vector<8x4xf32>
    %5 = arith.addf %3, %4 : vector<8x4xf32>
    %c0_4 = arith.constant 0 : index
    %c0_5 = arith.constant 0 : index
    %6 = vector.load %arg4[%c0_4, %c0_5] : memref<8x4xf32, #tpu.memory_space<vmem>>, vector<8x4xf32>
    tpu.vector_store %arg4[%c0_4, %c0_5], %5 {strides = array<i32>} : memref<8x4xf32, #tpu.memory_space<vmem>>, vector<8x4xf32>,
    return
  }
  func.func @transform_0(%arg0: i32) -> (i32, i32) {
    %c0_i32 = arith.constant 0 : i32
    %c0_i32_0 = arith.constant 0 : i32
    return %arg0, %c0_i32 : i32, i32
  }
  func.func @transform_1(%arg0: i32) -> (i32, i32) {
    %c0_i32 = arith.constant 0 : i32
    %c0_i32_0 = arith.constant 0 : i32
    %c0_i32_1 = arith.constant 0 : i32
    return %c0_i32, %c0_i32_0 : i32, i32
  }
  func.func @transform_2(%arg0: i32) -> i32 {
    %c0_i32 = arith.constant 0 : i32
    %c0_i32_0 = arith.constant 0 : i32
    return %c0_i32 : i32
  }
  func.func @transform_3(%arg0: i32) -> (i32, i32) {
    %c0_i32 = arith.constant 0 : i32
    %c0_i32_0 = arith.constant 0 : i32
    return %arg0, %c0_i32 : i32, i32
  }
}

</mosaic_0001>

<llo_original>
// kernel: tpu_custom_call.1
$region0: #{tpu_custom_call.1}
  #allocation0 [shape = 'u32[]', space=smem, size = 0x4, offset = 0x4, fixed_abs, tag = 'smem constant byte address 0x4 - core index']
  #allocation1 [shape = 'u32[144,128]{1,0:T(1,128)}', space=vmem, size = 0x12000, scoped, tag = 'internal scratch']
  #allocation2 [shape = 'f32[1]{0:T(128)S(6)}', space=smem, size = 0x200, scoped, tag = 'scoped memory for tpu_custom_call.1']
  %s0 = inlined_call_operand.vmem [shape: f32[8,128], index: 0, kind: input, shape index: {}]
  %s1 = inlined_call_operand.vmem [shape: f32[128,4], index: 1, kind: input, shape index: {}]
  %s2 = inlined_call_operand.<no memory space> [shape: f32[1], index: 2, kind: input, shape index: {}]
  %s3 = inlined_call_operand.vmem [shape: f32[8,4], index: 3, kind: output, shape index: {}]
  %s4 = sld [smem:[#allocation0]]
  $region22: #{tpu_custom_call.1} parent=0
    _
  %s6 = ssub.s32 1, %s4
  %s7 = scalar_select 0, %s6, %s4
  %8 = sst [smem:[#allocation2]] %s2
  // Predicated region
  $region2: #{tpu_custom_call.1} parent=0 // pred_check
    _
  $region3: #{tpu_custom_call.1} parent=0 // pred_check_branch
    %10 = sbr.rel (0) target = $region5
  $region4: #{tpu_custom_call.1} parent=0 // pred_region
    _
  $region5: #{tpu_custom_call.1} parent=0 // pred_fallthru
    _
  // Predicated region
  $region6: #{tpu_custom_call.1} parent=0 // pred_check
    _
  $region7: #{tpu_custom_call.1} parent=0 // pred_check_branch
    %12 = sbr.rel (0) target = $region9
  $region8: #{tpu_custom_call.1} parent=0 // pred_region
    _
  $region9: #{tpu_custom_call.1} parent=0 // pred_fallthru
    _
  // Predicated region
  $region10: #{tpu_custom_call.1} parent=0 // pred_check
    _
  $region11: #{tpu_custom_call.1} parent=0 // pred_check_branch
    %14 = sbr.rel (0) target = $region13
  $region12: #{tpu_custom_call.1} parent=0 // pred_region
    _
  $region13: #{tpu_custom_call.1} parent=0 // pred_fallthru
    _
  %s15 = sld [smem:[#allocation2]]
  %v16 = vld [vmem:[%s0] sm:$0xff]
  %v17 = vld [vmem:[%s1] sm:$0xff]
  %v18 = vld [vmem:[%s1 + $0x8] sm:$0xff]
  %v19 = vld [vmem:[%s1 + $0x10] sm:$0xff]
  %v20 = vld [vmem:[%s1 + $0x18] sm:$0xff]
  %v21 = vld [vmem:[%s1 + $0x20] sm:$0xff]
  %v22 = vld [vmem:[%s1 + $0x28] sm:$0xff]
  %v23 = vld [vmem:[%s1 + $0x30] sm:$0xff]
  %v24 = vld [vmem:[%s1 + $0x38] sm:$0xff]
  %v25 = vld [vmem:[%s1 + $0x40] sm:$0xff]
  %v26 = vld [vmem:[%s1 + $0x48] sm:$0xff]
  %v27 = vld [vmem:[%s1 + $0x50] sm:$0xff]
  %v28 = vld [vmem:[%s1 + $0x58] sm:$0xff]
  %v29 = vld [vmem:[%s1 + $0x60] sm:$0xff]
  %v30 = vld [vmem:[%s1 + $0x68] sm:$0xff]
  %v31 = vld [vmem:[%s1 + $0x70] sm:$0xff]
  %v32 = vld [vmem:[%s1 + $0x78] sm:$0xff]
  %v33 = vstv %s15
  %34 = vmatprep.subr.mxu0 0.0
  %35 = vmatpush1.msra.mxu0 %v17
  %36 = vmatprep.subr.mxu0 0.0
  %37 = vmatpush1.msra.mxu0 %v18
  %38 = vmatprep.subr.mxu0 0.0
  %39 = vmatpush1.msra.mxu0 %v19
  %40 = vmatprep.subr.mxu0 0.0
  %41 = vmatpush1.msra.mxu0 %v20
  %42 = vmatprep.subr.mxu0 0.0
  %43 = vmatpush1.msra.mxu0 %v21
  %44 = vmatprep.subr.mxu0 0.0
  %45 = vmatpush1.msra.mxu0 %v22
  %46 = vmatprep.subr.mxu0 0.0
  %47 = vmatpush1.msra.mxu0 %v23
  %48 = vmatprep.subr.mxu0 0.0
  %49 = vmatpush1.msra.mxu0 %v24
  %50 = vmatprep.subr.mxu0 0.0
  %51 = vmatpush1.msra.mxu0 %v25
  %52 = vmatprep.subr.mxu0 0.0
  %53 = vmatpush1.msra.mxu0 %v26
  %54 = vmatprep.subr.mxu0 0.0
  %55 = vmatpush1.msra.mxu0 %v27
  %56 = vmatprep.subr.mxu0 0.0
  %57 = vmatpush1.msra.mxu0 %v28
  %58 = vmatprep.subr.mxu0 0.0
  %59 = vmatpush1.msra.mxu0 %v29
  %60 = vmatprep.subr.mxu0 0.0
  %61 = vmatpush1.msra.mxu0 %v30
  %62 = vmatprep.subr.mxu0 0.0
  %63 = vmatpush1.msra.mxu0 %v31
  %64 = vmatprep.subr.mxu0 0.0
  %65 = vmatpush1.msra.mxu0 %v32
  %66 = vmatprep.subr.mxu0 0.0
  %67 = vmatpush1.msra.mxu0 0.0
  %68 = vmatprep.subr.mxu0 0.0
  %69 = vmatpush1.msra.mxu0 0.0
  %70 = vmatprep.subr.mxu0 0.0
  %71 = vmatpush1.msra.mxu0 0.0
  %72 = vmatprep.subr.mxu0 0.0
  %73 = vmatpush1.msra.mxu0 0.0
  %74 = vmatprep.subr.mxu0 0.0
  %75 = vmatpush1.msra.mxu0 0.0
  %76 = vmatprep.subr.mxu0 0.0
  %77 = vmatpush1.msra.mxu0 0.0
  %78 = vmatprep.subr.mxu0 0.0
  %79 = vmatpush1.msra.mxu0 0.0
  %80 = vmatprep.subr.mxu0 0.0
  %81 = vmatpush1.msra.mxu0 0.0
  %82 = vmatprep.subr.mxu0 0.0
  %83 = vmatpush1.msra.mxu0 0.0
  %84 = vmatprep.subr.mxu0 0.0
  %85 = vmatpush1.msra.mxu0 0.0
  %86 = vmatprep.subr.mxu0 0.0
  %87 = vmatpush1.msra.mxu0 0.0
  %88 = vmatprep.subr.mxu0 0.0
  %89 = vmatpush1.msra.mxu0 0.0
  %90 = vmatprep.subr.mxu0 0.0
  %91 = vmatpush1.msra.mxu0 0.0
  %92 = vmatprep.subr.mxu0 0.0
  %93 = vmatpush1.msra.mxu0 0.0
  %94 = vmatprep.subr.mxu0 0.0
  %95 = vmatpush1.msra.mxu0 0.0
  %96 = vmatprep.subr.mxu0 0.0
  %97 = vmatpush1.msra.mxu0 0.0
  %98 = vmatprep.mubr.f32.mxu0 0.0
  %99 = vmatmul.mubr.f32.gmra.mrb[0].mxu0 %v16
  %v100 = vpop.f32.mrb[0].mxu0
  %v101 = vadd.f32 %v33, %v100
  %v102 = vpop.f32.mrb[0].mxu0
  %103 = vdwg.mxu0
  %vm104 = vcmask 31744
  %105 = vst.msk [vmem:[%s3] sm:$0xff] %vm104, %v101
  // Predicated region
  $region14: #{tpu_custom_call.1} parent=0 // pred_check
    _
  $region15: #{tpu_custom_call.1} parent=0 // pred_check_branch
    %107 = sbr.rel (0) target = $region17
  $region16: #{tpu_custom_call.1} parent=0 // pred_region
    _
  $region17: #{tpu_custom_call.1} parent=0 // pred_fallthru
    _
  // Predicated region
  $region18: #{tpu_custom_call.1} parent=0 // pred_check
    _
  $region19: #{tpu_custom_call.1} parent=0 // pred_check_branch
    %109 = sbr.rel (0) target = $region21
  $region20: #{tpu_custom_call.1} parent=0 // pred_region
    _
  $region21: #{tpu_custom_call.1} parent=0 // pred_fallthru
    _

</llo_original>
